<compile_context>
chip_gen: v7x
topology: tpu7x:2x2x1
jax: 0.10.0
libtpu: 0.0.40
codegen_flags: <defaults>
</compile_context>

<pallas_src>
import functools

import jax
import jax.numpy as jnp
from jax import lax
from jax.experimental import pallas as pl
from jax.experimental.pallas import tpu as pltpu

GAMMA = 1.2                        # module default
_VMEM_BUDGET = 28 * 1024 * 1024    # accounted bytes: 2x dbuf inputs + f32 temps
_MAX_TILE = 64 * 1024              # batch elements per grid step (amortize ~0.35us/step)


def _focal_ce_kernel(n_ref, logits_ref, target_ref, out_ref, acc_ref, *, class_axis):
    """Accumulate summed cross entropy over batch tiles.

    Layouts (selected by class_axis):
      class_axis=0: logits (C, T), target (1, T), acc (1, T)  -- small C, batch on lanes
      class_axis=1: logits (T, C), target (T, 1), acc (T, 1)  -- natural layout, C on lanes
    """
    p = pl.program_id(0)            # batch shard (v7x: one per TensorCore)
    i = pl.program_id(1)            # sequential reduction over batch tiles
    inner = pl.num_programs(1)
    batch_axis = 1 - class_axis

    @pl.when(i == 0)
    def _init():
        acc_ref[...] = jnp.zeros_like(acc_ref)

    z = logits_ref[...].astype(jnp.float32)   # cast once in VMEM (input may be bf16)
    tgt = target_ref[...]                     # int32
    tile_n = z.shape[batch_axis]

    # Numerically-stable per-sample cross entropy along the class axis:
    #   ce = logsumexp(z) - z[target]
    m = jnp.max(z, axis=class_axis, keepdims=True)
    z = z - m
    lse = jnp.log(jnp.sum(jnp.exp(z), axis=class_axis, keepdims=True))
    class_ids = lax.broadcasted_iota(jnp.int32, z.shape, class_axis)
    tgt_logit = jnp.max(jnp.where(class_ids == tgt, z, -jnp.inf),
                        axis=class_axis, keepdims=True)
    ce = lse - tgt_logit                      # (1, T) or (T, 1)

    # Mask ragged tail / fully-out-of-range duplicate blocks BEFORE accumulating
    # so garbage data from partial DMAs can never reach acc_ref.
    pos = lax.broadcasted_iota(jnp.int32, ce.shape, batch_axis)
    global_pos = (p * inner + i) * tile_n + pos
    acc_ref[...] += jnp.where(global_pos < n_ref[0], ce, 0.0)

    @pl.when(i == inner - 1)
    def _finalize():
        out_ref[...] = jnp.reshape(jnp.sum(acc_ref[...]), (1, 1, 1))


def focal_loss(logits, target, gamma=GAMMA):
    """logits: [N, C] float (f32/bf16), target: [N] int class ids -> scalar f32."""
    n, c = logits.shape
    in_bytes = logits.dtype.itemsize

    # VMEM accounting per batch element per step: double-buffered inputs
    # (logits + i32 target) plus ~5 full-tile f32 elementwise temporaries
    # (cast, z, exp(z), class-id iota, where-select) plus one accumulator lane.
    per_elem = 2 * (c * in_bytes + 4) + 5 * c * 4 + 4
    use_natural = c >= 128            # lane-friendly class dim: keep (N, C) layout
    gran = 8 if use_natural else 128  # sublane vs lane granularity of the batch dim

    tile = min(_VMEM_BUDGET // per_elem, _MAX_TILE)
    if tile >= n:
        tile = n                      # whole batch in one (full-dim) block, no padding
    else:
        tile = max(gran, (tile // gran) * gran)

    total_steps = pl.cdiv(n, tile)
    num_splits = min(2, total_steps)  # v7x: shard the batch over the two TCs
    inner = pl.cdiv(total_steps, num_splits)
    last_blk = total_steps - 1

    def _blk(p, i):
        # Clamp so a core's over-the-end step re-reads a valid block; the
        # in-kernel mask (computed from the *unclamped* position) zeroes it.
        return jnp.minimum(p * inner + i, last_blk)

    target_i32 = target.astype(jnp.int32)
    if use_natural:
        logits_in = logits                        # (N, C): no transpose, no cast, no pad
        target_in = target_i32.reshape(n, 1)
        class_axis = 1
        logits_spec = pl.BlockSpec((tile, c), lambda p, i, nref: (_blk(p, i), 0))
        target_spec = pl.BlockSpec((tile, 1), lambda p, i, nref: (_blk(p, i), 0))
        acc_shape = (tile, 1)
    else:
        # Small class count: classes on sublanes, batch rides the 128-lane axis.
        logits_in = jnp.transpose(logits)         # (C, N), original dtype
        target_in = target_i32.reshape(1, n)
        class_axis = 0
        logits_spec = pl.BlockSpec((c, tile), lambda p, i, nref: (0, _blk(p, i)))
        target_spec = pl.BlockSpec((1, tile), lambda p, i, nref: (0, _blk(p, i)))
        acc_shape = (1, tile)

    n_arr = jnp.array([n], dtype=jnp.int32)       # SMEM scalar: true batch size

    partials = pl.pallas_call(
        functools.partial(_focal_ce_kernel, class_axis=class_axis),
        out_shape=jax.ShapeDtypeStruct((num_splits, 1, 1), jnp.float32),
        grid_spec=pltpu.PrefetchScalarGridSpec(
            num_scalar_prefetch=1,
            grid=(num_splits, inner),
            in_specs=[logits_spec, target_spec],
            out_specs=pl.BlockSpec((1, 1, 1), lambda p, i, nref: (p, 0, 0)),
            scratch_shapes=[pltpu.VMEM(acc_shape, jnp.float32)],
        ),
        compiler_params=pltpu.CompilerParams(
            dimension_semantics=("parallel", "arbitrary"),
            # 48 MiB: generous on v5e/v6e (128 MiB physical), safe on v7x (64 MiB).
            vmem_limit_bytes=48 * 1024 * 1024,
        ),
    )(n_arr, logits_in, target_in)

    # Combine per-core partial CE sums and apply the focal transform to the
    # mean CE (a handful of scalar ops; matches the PyTorch module exactly).
    mean_ce = jnp.sum(partials) / jnp.float32(n)
    logpt = -mean_ce
    one_minus_pt = -jnp.expm1(logpt)              # 1 - exp(logpt), stable near 0
    return -(one_minus_pt ** jnp.float32(gamma)) * logpt


def _focal_loss_ref(logits, target, gamma=GAMMA):
    # Pure-JAX reference mirroring torch.nn.functional.cross_entropy (mean).
    logp = jax.nn.log_softmax(logits.astype(jnp.float32), axis=-1)
    nll = -jnp.take_along_axis(logp, target[:, None].astype(jnp.int32), axis=-1)
    mean_ce = jnp.mean(nll)
    logpt = -mean_ce
    pt = jnp.exp(logpt)
    return -((1.0 - pt) ** gamma) * logpt


if __name__ == "__main__":
    key = jax.random.PRNGKey(0)
    k1, k2, k3, k4 = jax.random.split(key, 4)

    # Small-C path (classes on sublanes, batch on the 128-lane axis).
    N, C = 16, 8
    logits = jax.random.normal(k1, (N, C), dtype=jnp.float32)
    target = jax.random.randint(k2, (N,), 0, C, dtype=jnp.int32)
    loss = focal_loss(logits, target)
    jax.block_until_ready(loss)
    ref = _focal_loss_ref(logits, target)
    assert jnp.allclose(loss, ref, rtol=1e-4, atol=1e-6), (loss, ref)

    # Lane-friendly-C path (natural (N, C) layout, no wrapper transpose).
    N2, C2 = 64, 256
    logits2 = jax.random.normal(k3, (N2, C2), dtype=jnp.float32)
    target2 = jax.random.randint(k4, (N2,), 0, C2, dtype=jnp.int32)
    loss2 = focal_loss(logits2, target2)
    jax.block_until_ready(loss2)
    ref2 = _focal_loss_ref(logits2, target2)
    assert jnp.allclose(loss2, ref2, rtol=1e-4, atol=1e-6), (loss2, ref2)

    print("KERNEL_OK")
</pallas_src>

<mosaic_0001>
module attributes {stable_mosaic.version = 11 : i64} {
  func.func @_focal_ce_kernel(%arg0: i32, %arg1: i32, %arg2: memref<1xi32, #tpu.memory_space<smem>>, %arg3: memref<8x16xf32, #tpu.memory_space<vmem>>, %arg4: memref<1x16xi32, #tpu.memory_space<vmem>>, %arg5: memref<1x1x1xf32, #tpu.memory_space<vmem>>, %arg6: memref<1x16xf32, #tpu.memory_space<vmem>>) attributes {dimension_semantics = [#tpu.dimension_semantics<parallel>, #tpu.dimension_semantics<arbitrary>], iteration_bounds = array<i64: 1, 1>, scalar_prefetch = 1 : i64, scratch_operands = 1 : i64, tpu.core_type = #tpu.core_type<tc>, window_params = [{transform_indices = @transform_0, window_bounds = array<i64: 8, 16>}, {transform_indices = @transform_1, window_bounds = array<i64: 1, 16>}, {transform_indices = @transform_2, window_bounds = array<i64: 1, 1, 1>}]} {
    %c0_i32 = arith.constant 0 : i32
    %0 = arith.cmpi eq, %arg1, %c0_i32 : i32
    %1 = arith.extui %0 : i1 to i32
    %c0_i32_0 = arith.constant 0 : i32
    %2 = arith.cmpi ne, %1, %c0_i32_0 : i32
    scf.if %2 {
      %cst_15 = arith.constant 0.000000e+00 : f32
      %38 = vector.broadcast %cst_15 : f32 to vector<1x16xf32>
      %c0_16 = arith.constant 0 : index
      %c0_17 = arith.constant 0 : index
      %39 = vector.load %arg6[%c0_16, %c0_17] : memref<1x16xf32, #tpu.memory_space<vmem>>, vector<1x16xf32>
      tpu.vector_store %arg6[%c0_16, %c0_17], %38 {strides = array<i32>} : memref<1x16xf32, #tpu.memory_space<vmem>>, vector<1x16xf32>,
    } else {
    }
    %c0 = arith.constant 0 : index
    %c0_1 = arith.constant 0 : index
    %3 = vector.load %arg3[%c0, %c0_1] : memref<8x16xf32, #tpu.memory_space<vmem>>, vector<8x16xf32>
    %c0_2 = arith.constant 0 : index
    %c0_3 = arith.constant 0 : index
    %4 = vector.load %arg4[%c0_2, %c0_3] : memref<1x16xi32, #tpu.memory_space<vmem>>, vector<1x16xi32>
    %cst = arith.constant dense<0xFF800000> : vector<16xf32>
    %5 = vector.multi_reduction <maximumf>, %3, %cst [0] : vector<8x16xf32> to vector<16xf32>
    %6 = vector.shape_cast %5 : vector<16xf32> to vector<1x16xf32>
    %7 = vector.broadcast %6 : vector<1x16xf32> to vector<8x16xf32>
    %8 = arith.subf %3, %7 : vector<8x16xf32>
    %9 = math.exp %8 : vector<8x16xf32>
    %cst_4 = arith.constant dense<0.000000e+00> : vector<16xf32>
    %10 = vector.multi_reduction <add>, %9, %cst_4 [0] : vector<8x16xf32> to vector<16xf32>
    %11 = vector.shape_cast %10 : vector<16xf32> to vector<1x16xf32>
    %12 = math.log %11 : vector<1x16xf32>
    %13 = tpu.iota {dimensions = array<i32: 0>} : vector<8x16xi32>
    %14 = vector.broadcast %4 : vector<1x16xi32> to vector<8x16xi32>
    %15 = arith.cmpi eq, %13, %14 : vector<8x16xi32>
    %cst_5 = arith.constant 0xFF800000 : f32
    %16 = vector.broadcast %cst_5 : f32 to vector<8x16xf32>
    %17 = arith.select %15, %8, %16 : vector<8x16xi1>, vector<8x16xf32>
    %cst_6 = arith.constant dense<0xFF800000> : vector<16xf32>
    %18 = vector.multi_reduction <maximumf>, %17, %cst_6 [0] : vector<8x16xf32> to vector<16xf32>
    %19 = vector.shape_cast %18 : vector<16xf32> to vector<1x16xf32>
    %20 = arith.subf %12, %19 : vector<1x16xf32>
    %21 = tpu.iota {dimensions = array<i32: 1>} : vector<1x16xi32>
    %c1_i32 = arith.constant 1 : i32
    %22 = arith.muli %arg0, %c1_i32 : i32
    %23 = arith.addi %22, %arg1 : i32
    %c16_i32 = arith.constant 16 : i32
    %24 = arith.muli %23, %c16_i32 : i32
    %25 = vector.broadcast %24 : i32 to vector<1x16xi32>
    %26 = arith.addi %25, %21 : vector<1x16xi32>
    %c0_7 = arith.constant 0 : index
    %c0_8 = arith.constant 0 : index
    %27 = vector.load %arg6[%c0_7, %c0_8] : memref<1x16xf32, #tpu.memory_space<vmem>>, vector<1x16xf32>
    %c0_9 = arith.constant 0 : index
    %28 = memref.load %arg2[%c0_9] : memref<1xi32, #tpu.memory_space<smem>>
    %29 = vector.broadcast %28 : i32 to vector<1x16xi32>
    %30 = arith.cmpi slt, %26, %29 : vector<1x16xi32>
    %cst_10 = arith.constant 0.000000e+00 : f32
    %31 = vector.broadcast %cst_10 : f32 to vector<1x16xf32>
    %32 = arith.select %30, %20, %31 : vector<1x16xi1>, vector<1x16xf32>
    %33 = arith.addf %27, %32 : vector<1x16xf32>
    %c0_11 = arith.constant 0 : index
    %c0_12 = arith.constant 0 : index
    %34 = vector.load %arg6[%c0_11, %c0_12] : memref<1x16xf32, #tpu.memory_space<vmem>>, vector<1x16xf32>
    tpu.vector_store %arg6[%c0_11, %c0_12], %33 {strides = array<i32>} : memref<1x16xf32, #tpu.memory_space<vmem>>, vector<1x16xf32>,
    %c0_i32_13 = arith.constant 0 : i32
    %35 = arith.cmpi eq, %arg1, %c0_i32_13 : i32
    %36 = arith.extui %35 : i1 to i32
    %c0_i32_14 = arith.constant 0 : i32
    %37 = arith.cmpi ne, %36, %c0_i32_14 : i32
    scf.if %37 {
      %c0_15 = arith.constant 0 : index
      %c0_16 = arith.constant 0 : index
      %38 = vector.load %arg6[%c0_15, %c0_16] : memref<1x16xf32, #tpu.memory_space<vmem>>, vector<1x16xf32>
      %39 = vector.shape_cast %38 : vector<1x16xf32> to vector<1x1x16xf32>
      %cst_17 = arith.constant dense<0.000000e+00> : vector<1xf32>
      %40 = vector.multi_reduction <add>, %39, %cst_17 [1, 2] : vector<1x1x16xf32> to vector<1xf32>
      %41 = vector.shape_cast %40 : vector<1xf32> to vector<1x1x1xf32>
      %42 = vector.extract %41[0, 0, 0] : f32 from vector<1x1x1xf32>
      %43 = vector.broadcast %42 : f32 to vector<1x1x1xf32>
      %c0_18 = arith.constant 0 : index
      %c0_19 = arith.constant 0 : index
      %c0_20 = arith.constant 0 : index
      %44 = vector.load %arg5[%c0_18, %c0_19, %c0_20] : memref<1x1x1xf32, #tpu.memory_space<vmem>>, vector<1x1x1xf32>
      tpu.vector_store %arg5[%c0_18, %c0_19, %c0_20], %43 {strides = array<i32>} : memref<1x1x1xf32, #tpu.memory_space<vmem>>, vector<1x1x1xf32>,
    } else {
    }
    return
  }
  func.func @transform_0(%arg0: i32, %arg1: i32, %arg2: memref<1xi32, #tpu.memory_space<smem>>) -> (i32, i32) {
    %c1_i32 = arith.constant 1 : i32
    %0 = arith.muli %arg0, %c1_i32 : i32
    %1 = arith.addi %0, %arg1 : i32
    %c0_i32 = arith.constant 0 : i32
    %2 = arith.minsi %1, %c0_i32 : i32
    %c0_i32_0 = arith.constant 0 : i32
    %c0_i32_1 = arith.constant 0 : i32
    return %c0_i32_0, %2 : i32, i32
  }
  func.func @transform_1(%arg0: i32, %arg1: i32, %arg2: memref<1xi32, #tpu.memory_space<smem>>) -> (i32, i32) {
    %c1_i32 = arith.constant 1 : i32
    %0 = arith.muli %arg0, %c1_i32 : i32
    %1 = arith.addi %0, %arg1 : i32
    %c0_i32 = arith.constant 0 : i32
    %2 = arith.minsi %1, %c0_i32 : i32
    %c0_i32_0 = arith.constant 0 : i32
    %c0_i32_1 = arith.constant 0 : i32
    return %c0_i32_0, %2 : i32, i32
  }
  func.func @transform_2(%arg0: i32, %arg1: i32, %arg2: memref<1xi32, #tpu.memory_space<smem>>) -> (i32, i32, i32) {
    %c0_i32 = arith.constant 0 : i32
    %c0_i32_0 = arith.constant 0 : i32
    %c0_i32_1 = arith.constant 0 : i32
    return %arg0, %c0_i32, %c0_i32_0 : i32, i32, i32
  }
}

</mosaic_0001>

<llo_original>
// kernel: tpu_custom_call.1
$region0: #{tpu_custom_call.1}
  #allocation0 [shape = 'u32[]', space=smem, size = 0x4, offset = 0x4, fixed_abs, tag = 'smem constant byte address 0x4 - core index']
  #allocation1 [shape = 'u32[144,128]{1,0:T(1,128)}', space=vmem, size = 0x12000, scoped, tag = 'internal scratch']
  #allocation2 [shape = 'f32[1,16]{1,0:T(1,128)}', space=vmem, size = 0x200, scoped, tag = 'scratch operand']
  #allocation3 [shape = 's32[1]{0}', space=sflag, size = 0x4, scoped, tag = 'scoped memory for tpu_custom_call.1']
  #allocation4 [shape = 's32[1]{0:T(128)S(6)}', space=smem, size = 0x200, scoped, tag = 'prefetched SMEM operand 0']
  %s0 = inlined_call_operand.<no memory space> [shape: s32[1], index: 0, kind: input, shape index: {}]
  %s1 = inlined_call_operand.hbm [shape: f32[8,16], index: 1, kind: input, shape index: {}]
  %s2 = inlined_call_operand.vmem [shape: s32[1,16], index: 2, kind: input, shape index: {}]
  %s3 = inlined_call_operand.hbm [shape: f32[1,1,1], index: 3, kind: output, shape index: {}]
  %s4 = sld [smem:[#allocation0]]
  $region30: #{tpu_custom_call.1} parent=0
    _
  %s6 = ssub.s32 1, %s4
  %s7 = scalar_select 0, %s6, %s4
  %8 = sst [smem:[#allocation4]] %s0
  $region1: #{tpu_custom_call.1} parent=0
    #allocation5 [shape = 'u8[4096]{0}', space=vmem, size = 0x1000, scoped, tag = 'input window, operand 1, single buffered']
    #allocation6 [shape = 's32[1]{0}', space=sflag, size = 0x4, scoped, tag = 'scoped memory for tpu_custom_call.1']
    #allocation7 [shape = 's32[1]{0}', space=sflag, size = 0x4, scoped, tag = 'scoped memory for tpu_custom_call.1']
    #allocation8 [shape = 'u8[512]{0}', space=vmem, size = 0x400, scoped, tag = 'output window, operand 0, single buffered']
    %9 = vsyncpa [#allocation6], 0
    %10 = vsyncpa [#allocation7], 0
    // Predicated region
    $region2: #{tpu_custom_call.1} parent=1 // pred_check
      _
    $region3: #{tpu_custom_call.1} parent=1 // pred_check_branch
      %12 = sbr.rel (0) target = $region5
    $region4: #{tpu_custom_call.1} parent=1 // pred_region
      %s13 = sadd.s32 0, 0
      %p14 = scmp.lt.s32.totalorder %s13, 0
      %s15 = scalar_select %p14, %s13, 0
      %s17 = ssub.s32 128, 128
      %18 = vsyncadd [#allocation6], %s17
      %s19 = smul.addr %s15, 128
      %s20 = scalar_lea.hbm %s1, %s19
      %s22 = sshll.u32 [#allocation5], 4
      %s23 = int_to_ptr.vmem [resolvable:$true] %s22
      %25 = dma.hbm_to_vmem [thread:$0]  %s20, 128, %s23, [#allocation6]
    $region5: #{tpu_custom_call.1} parent=1 // pred_fallthru
      _
    // Predicated region
    $region6: #{tpu_custom_call.1} parent=1 // pred_check
      _
    $region7: #{tpu_custom_call.1} parent=1 // pred_check_branch
      %27 = sbr.rel (0) target = $region9
    $region8: #{tpu_custom_call.1} parent=1 // pred_region
      %s28 = sadd.s32 0, 0
      %p29 = scmp.lt.s32.totalorder %s28, 0
      %s30 = scalar_select %p29, %s28, 0
      %p31 = scmp.lt.s32.totalorder %s30, 0
      %s32 = scalar_select %p31, %s30, 0
      %s33 = scalar_lea.vmem %s2, %s32
      %s34 = sadd.s32 0, 0
      %p35 = scmp.lt.s32.totalorder %s34, 0
      %s36 = scalar_select %p35, %s34, 0
    $region9: #{tpu_custom_call.1} parent=1 // pred_fallthru
      _
    // Predicated region
    $region10: #{tpu_custom_call.1} parent=1 // pred_check
      _
    $region11: #{tpu_custom_call.1} parent=1 // pred_check_branch
      %38 = sbr.rel (0) target = $region13
    $region12: #{tpu_custom_call.1} parent=1 // pred_region
      %39 = dma.done [#allocation6], 128
    $region13: #{tpu_custom_call.1} parent=1 // pred_fallthru
      _
    %s40 = sadd.s32 0, 0
    %p41 = scmp.lt.s32.totalorder %s40, 0
    %s42 = scalar_select %p41, %s40, 0
    %p43 = scmp.lt.s32.totalorder %s42, 0
    %s44 = scalar_select %p43, %s42, 0
    %s45 = scalar_lea.vmem %s2, %s44
    %s46 = sadd.s32 0, 0
    %p47 = scmp.lt.s32.totalorder %s46, 0
    %s48 = scalar_select %p47, %s46, 0
    %s49 = sadd.s32 0, 0
    %p50 = scmp.lt.s32.totalorder %s49, 0
    %s51 = scalar_select %p50, %s49, 0
    %p52 = scmp.lt.s32.totalorder %s51, 0
    %s53 = scalar_select %p52, %s51, 0
    %s54 = scalar_lea.vmem %s2, %s53
    %s55 = sadd.s32 0, 0
    %p56 = scmp.lt.s32.totalorder %s55, 0
    %s57 = scalar_select %p56, %s55, 0
    %p58 = scmp.eq.s32.totalorder 0, 0
    // Predicated region
    $region14: #{tpu_custom_call.1} parent=1 // pred_check
      %p59 = pneg %p58
    $region15: #{tpu_custom_call.1} parent=1 // pred_check_branch
      %61 = sbr.rel (%p59) target = $region17
    $region16: #{tpu_custom_call.1} parent=1 // pred_region
      %vm62 = vcmask 122880
      %63 = vst.msk [vmem:[#allocation2] sm:$0x1] %vm62, 0.0
    $region17: #{tpu_custom_call.1} parent=1 // pred_fallthru
      _
    %v64 = vld [vmem:[#allocation5] sm:$0xff]
    %v65 = vld [vmem:[%s54] sm:$0x1]
    %vm66 = vcmask 130048
    %v67 = vsel %vm66, %v64, -inf
    %v68 = vrot.slane %v67, 4
    %v69 = vmax.f32 %v67, %v68
    %v70 = vrot.slane %v69, 2
    %v71 = vmax.f32 %v69, %v70
    %v72 = vrot.slane %v71, 1
    %v73 = vmax.f32 %v71, %v72
    %v74 = vsub.f32 %v64, %v73
    %v75 = vmul.f32 %v74, 1.442695
    %v76 = vpow.pop %v75
    %v77 = vsel %vm66, %v76, 0.0
    %v78 = vrot.slane %v77, 4
    %v79 = vadd.f32 %v77, %v78
    %v80 = vrot.slane %v79, 2
    %v81 = vadd.f32 %v79, %v80
    %v82 = vrot.slane %v81, 1
    %v83 = vadd.f32 %v81, %v82
    %v84 = vlog2.pop %v83
    %v85 = vmul.f32 %v84, 0.6931472
    %v86 = vlaneseq
    %v87 = vshrl.u32 %v86, 7
    %v88 = vlaneseq
    %v89 = vshrl.u32 %v88, 7
    %v90 = vsub.s32 0, %v89
    %v91 = vrot.slane %v65, %v90
    %vm92 = vcmp.eq.s32.totalorder %v87, %v91
    %v93 = vsel %vm92, %v74, -inf
    %v94 = vsel %vm66, %v93, -inf
    %v95 = vrot.slane %v94, 4
    %v96 = vmax.f32 %v94, %v95
    %v97 = vrot.slane %v96, 2
    %v98 = vmax.f32 %v96, %v97
    %v99 = vrot.slane %v98, 1
    %v100 = vmax.f32 %v98, %v99
    %v101 = vsub.f32 %v85, %v100
    %v102 = vlaneseq
    %v103 = vand.u32 %v102, 127
    %s104 = sadd.s32 0, 0
    %s105 = smul.u32 %s104, 16
    %v106 = vstv %s105
    %v107 = vadd.s32 %v106, %v103
    %v108 = vld [vmem:[#allocation2] sm:$0x1]
    %s109 = sld [smem:[#allocation4]]
    %v110 = vstv %s109
    %vm111 = vcmp.lt.s32.totalorder %v107, %v110
    %v112 = vsel %vm111, %v101, 0.0
    %v113 = vadd.f32 %v108, %v112
    %vm114 = vcmask 122880
    %115 = vst.msk [vmem:[#allocation2] sm:$0x1] %vm114, %v113
    // Predicated region
    $region18: #{tpu_custom_call.1} parent=1 // pred_check
      %p116 = pneg %p58
    $region19: #{tpu_custom_call.1} parent=1 // pred_check_branch
      %118 = sbr.rel (%p116) target = $region21
    $region20: #{tpu_custom_call.1} parent=1 // pred_region
      %v119 = vld [vmem:[#allocation2] sm:$0x1]
      %v120 = vsel %vm114, %v119, 0.0
      %121 = vadd.xlane.f32.xlu0 %v120
      %v122 = vpop.xlane.xlu0 %121
      %v123 = vrot.slane %v122, 4
      %v124 = vadd.f32 %v122, %v123
      %v125 = vrot.slane %v124, 2
      %v126 = vadd.f32 %v124, %v125
      %v127 = vrot.slane %v126, 1
      %v128 = vadd.f32 %v126, %v127
      %s129 = vtos %v128
      %v130 = vstv %s129
      %vm131 = vcmask 0
      %132 = vst.msk [vmem:[#allocation8] sm:$0x1] %vm131, %v130
    $region21: #{tpu_custom_call.1} parent=1 // pred_fallthru
      _
    // Predicated region
    $region22: #{tpu_custom_call.1} parent=1 // pred_check
      _
    $region23: #{tpu_custom_call.1} parent=1 // pred_check_branch
      %134 = sbr.rel (0) target = $region25
    $region24: #{tpu_custom_call.1} parent=1 // pred_region
      %s136 = ssub.s32 16, 16
      %137 = vsyncadd [#allocation7], %s136
      %s139 = sshll.u32 [#allocation8], 4
      %s140 = int_to_ptr.vmem [resolvable:$true] %s139
      %142 = dma.vmem_to_hbm [thread:$0]  %s140, 16, %s3, [#allocation7]
    $region25: #{tpu_custom_call.1} parent=1 // pred_fallthru
      _
    // Predicated region
    $region26: #{tpu_custom_call.1} parent=1 // pred_check
      _
    $region27: #{tpu_custom_call.1} parent=1 // pred_check_branch
      %144 = sbr.rel (0) target = $region29
    $region28: #{tpu_custom_call.1} parent=1 // pred_region
      %145 = dma.done [#allocation7], 16
    $region29: #{tpu_custom_call.1} parent=1 // pred_fallthru
      _
    %146 = vsyncpa [#allocation6], 1
    %147 = vsyncpa [#allocation7], 1

</llo_original>
